<compile_context>
chip_gen: v6e
topology: v6e:2x2x1
jax: 0.10.0
libtpu: 0.0.40
codegen_flags: <defaults>
</compile_context>

<pallas_src>
import jax
import jax.numpy as jnp
from jax.experimental import pallas as pl
from jax.experimental.pallas import tpu as pltpu

HIDDEN = 32

W_ROWS = 8                     # packed weight rows (one sublane group); rows 6..7 unused
ROW_ANGLE = 0
ROW_SM_LO, ROW_SM_HI = 1, 5    # 5 slope-material rows (inclusive)
N_OUT = 9                      # output slab rows: angle, 5x slope, friction, 2x prob
ROW_FRIC = 6
ROW_PROB0, ROW_PROB1 = 7, 8

SINGLE_TILE_MAX = 256          # batches up to this run as one exact tile (block == array dims)
TILE_B_MAX = 32768             # upper bound on rows per tile on the multi-tile path
VMEM_BUDGET = 12 << 20         # double-buffered z+out budget; fits v5e's 16 MiB scoped default


def _round_up(x, m):
    return (x + m - 1) // m * m


# ------------------------------------------------------------------ kernel ---

def binary_decoder_kernel(z_ref, w_ref, b_ref, fric_ref, out_ref):
    # z_ref: (tile_b, n_latents); w_ref: (8, n_latents); b_ref: (8, 1); fric_ref: (5, 1)
    # Single fused MXU matmul with the batch on the 128-lane axis:
    #   y[0, :] = angle, y[1:6, :] = slope logits, y[6:8, :] = 0 (padding rows).
    y = jax.lax.dot_general(
        w_ref[...], z_ref[...],
        dimension_numbers=(((1,), (1,)), ((), ())),          # contract over n_latents
        preferred_element_type=jnp.float32) + b_ref[...]

    angle = y[ROW_ANGLE:ROW_ANGLE + 1, :]                     # (1, tb) static sublane row
    logits = y[ROW_SM_LO:ROW_SM_HI + 1, :]                    # (5, tb)

    # Softmax over the 5 slope-material rows (tiny sublane reduce, lane-dense work).
    m = jnp.max(logits, axis=0, keepdims=True)
    e = jnp.exp(logits - m)
    denom = jnp.sum(e, axis=0, keepdims=True)
    slope = e / denom                                         # exact divide (free once lane-dense)

    # friction = sum(slope_material * friction_coeff, -1)
    fric = jnp.sum(slope * fric_ref[...], axis=0, keepdims=True)        # (1, tb)

    # prob = sigmoid([fric*cos(angle); sin(angle)]) -- the two sigmoids fused
    # into one EUP pass over a (2, tb) lane-dense stack.
    pre = jnp.concatenate([fric * jnp.cos(angle), jnp.sin(angle)], axis=0)
    prob = jax.nn.sigmoid(pre)                                # (2, tb)

    # Static sublane-row stores into the lane-dense (9, tile_b) output slab.
    out_ref[ROW_ANGLE:ROW_ANGLE + 1, :] = angle
    out_ref[ROW_SM_LO:ROW_SM_HI + 1, :] = slope
    out_ref[ROW_FRIC:ROW_FRIC + 1, :] = fric
    out_ref[ROW_PROB0:ROW_PROB1 + 1, :] = prob


# ---------------------------------------------------------------- wrapper ---

def fold_params(p):
    """Fold the activation-free Linear chains into packed, out-major params.

    Input weights are (in, out) (pre-transposed PyTorch layout), biases (1, out).
    Returns w_packed (8, n_latents), b_packed (8, 1), fric_packed (5, 1).
    """
    w_s = p["w1s"] @ p["w2s"] @ p["w3s"] @ p["wsm"]                                   # (nl, 5)
    b_s = ((p["b1s"] @ p["w2s"] + p["b2s"]) @ p["w3s"] + p["b3s"]) @ p["wsm"] + p["bsm"]
    w_a = p["w1a"] @ p["w2a"] @ p["w3a"] @ p["wang"]                                  # (nl, 1)
    b_a = ((p["b1a"] @ p["w2a"] + p["b2a"]) @ p["w3a"] + p["b3a"]) @ p["wang"] + p["bang"]

    n_latents = w_s.shape[0]
    w_packed = jnp.zeros((W_ROWS, n_latents), jnp.float32)
    w_packed = w_packed.at[ROW_ANGLE:ROW_ANGLE + 1, :].set(w_a.T)
    w_packed = w_packed.at[ROW_SM_LO:ROW_SM_HI + 1, :].set(w_s.T)

    b_packed = jnp.zeros((W_ROWS, 1), jnp.float32)
    b_packed = b_packed.at[ROW_ANGLE:ROW_ANGLE + 1, :].set(b_a.T)
    b_packed = b_packed.at[ROW_SM_LO:ROW_SM_HI + 1, :].set(b_s.T)

    fric_packed = p["fric"].T.astype(jnp.float32)                                     # (5, 1)
    return w_packed, b_packed, fric_packed


def _pick_tile(B, n_latents):
    """Choose (tile_b, grid_b).  Small B: one exact tile.  Large B: 128-multiple
    lane tiles, >=4 grid steps for megacore, capped by a VMEM byte budget."""
    if B <= SINGLE_TILE_MAX:
        return B, 1
    per_row = 2 * 4 * (n_latents + N_OUT)                  # double-buffered f32 in + out bytes/row
    cap = max(128, (VMEM_BUDGET // per_row) // 128 * 128)
    cap = min(cap, TILE_B_MAX)
    tile_b = min(cap, max(128, _round_up(pl.cdiv(B, 4), 128)))
    return tile_b, pl.cdiv(B, tile_b)


def binary_decoder_forward(z, params):
    """params: dict with pre-transposed weights (in,out), biases (1,out), fric (1,5)."""
    z = z.astype(jnp.float32)
    B, n_latents = z.shape
    w_packed, b_packed, fric_packed = fold_params(params)      # once per param update
    # TODO(synk): casting z/w_packed to bf16 for the MXU would ~halve the dominant HBM
    # read, but the wrapper-side cast adds its own HBM pass and perturbs numerics
    # (~1e-3 rel); kept f32 to preserve the reference module's precision.

    tile_b, grid_b = _pick_tile(B, n_latents)

    cost = pl.CostEstimate(
        flops=2 * B * n_latents * (ROW_SM_HI + 1) + 24 * B,
        transcendentals=9 * B,                                 # 5x exp + cos + sin + 2x sigmoid
        bytes_accessed=4 * (B * (n_latents + N_OUT) + W_ROWS * (n_latents + 1) + 5),
    )

    out = pl.pallas_call(
        binary_decoder_kernel,
        out_shape=jax.ShapeDtypeStruct((N_OUT, B), jnp.float32),
        grid=(grid_b,),
        in_specs=[
            pl.BlockSpec((tile_b, n_latents), lambda i: (i, 0)),   # z: batch-tiled
            pl.BlockSpec((W_ROWS, n_latents), lambda i: (0, 0)),   # packed weight (VMEM resident)
            pl.BlockSpec((W_ROWS, 1), lambda i: (0, 0)),           # packed bias   (VMEM resident)
            pl.BlockSpec((5, 1), lambda i: (0, 0)),                # friction coeff (VMEM resident)
        ],
        out_specs=pl.BlockSpec((N_OUT, tile_b), lambda i: (0, i)), # lane-dense output slab
        compiler_params=pltpu.CompilerParams(
            dimension_semantics=("parallel",),                     # megacore batch split (v7x)
            vmem_limit_bytes=32 * 1024 * 1024,                     # headroom over v5e's 16 MiB default
        ),
        cost_estimate=cost,
    )(z, w_packed, b_packed, fric_packed)

    angle = out[ROW_ANGLE:ROW_ANGLE + 1, :].T      # (B, 1)
    slope = out[ROW_SM_LO:ROW_SM_HI + 1, :].T      # (B, 5)
    fric = out[ROW_FRIC:ROW_FRIC + 1, :].T         # (B, 1)
    prob = out[ROW_PROB0:ROW_PROB1 + 1, :].T       # (B, 2)
    return prob, (angle, slope, fric)


# --------------------------------------------------------------- test bits ---

def init_params(key, n_latents):
    """Deterministic PyTorch-Linear-style init; weights returned as (in, out)."""
    def linear(key, fan_in, fan_out):
        k1, k2 = jax.random.split(key)
        bound = 1.0 / jnp.sqrt(fan_in)
        w = jax.random.uniform(k1, (fan_in, fan_out), jnp.float32, -bound, bound)
        b = jax.random.uniform(k2, (1, fan_out), jnp.float32, -bound, bound)
        return w, b

    keys = jax.random.split(key, 8)
    p = {}
    p["w1s"], p["b1s"] = linear(keys[0], n_latents, HIDDEN)
    p["w2s"], p["b2s"] = linear(keys[1], HIDDEN, HIDDEN)
    p["w3s"], p["b3s"] = linear(keys[2], HIDDEN, HIDDEN)
    p["w1a"], p["b1a"] = linear(keys[3], n_latents, HIDDEN)
    p["w2a"], p["b2a"] = linear(keys[4], HIDDEN, HIDDEN)
    p["w3a"], p["b3a"] = linear(keys[5], HIDDEN, HIDDEN)
    p["wang"], p["bang"] = linear(keys[6], HIDDEN, 1)
    p["wsm"], p["bsm"] = linear(keys[7], HIDDEN, 5)
    p["fric"] = jnp.zeros((1, 5), jnp.float32)  # module init: torch.ones(1,5)*0.0
    return p


def reference_forward(z, p):
    """Plain-JAX reference mirroring the PyTorch forward exactly (unfused)."""
    h_s = z @ p["w1s"] + p["b1s"]
    h_s = h_s @ p["w2s"] + p["b2s"]
    h_s = h_s @ p["w3s"] + p["b3s"]
    h_a = z @ p["w1a"] + p["b1a"]
    h_a = h_a @ p["w2a"] + p["b2a"]
    h_a = h_a @ p["w3a"] + p["b3a"]
    angle = h_a @ p["wang"] + p["bang"]
    slope = jax.nn.softmax(h_s @ p["wsm"] + p["bsm"], axis=-1)
    fric = jnp.sum(slope * p["fric"], axis=-1, keepdims=True)
    label = jnp.concatenate([fric * jnp.cos(angle), jnp.sin(angle)], axis=-1)
    prob = jax.nn.sigmoid(label)
    return prob, (angle, slope, fric)


if __name__ == "__main__":
    key = jax.random.PRNGKey(0)
    kz, kp, kf, kz2 = jax.random.split(key, 4)

    N_LATENTS = 16
    params = init_params(kp, N_LATENTS)
    # Non-zero friction_coeff (as after training) so the friction path is exercised
    # non-trivially; the module's own init (zeros) would make prob[:,0] identically 0.5.
    params["fric"] = jax.random.uniform(kf, (1, 5), jnp.float32, -1.0, 1.0)

    # --- small batch: single exact-tile path ---
    B = 8
    z = jax.random.normal(kz, (B, N_LATENTS), jnp.float32)
    prob, (angle, slope, fric) = binary_decoder_forward(z, params)
    jax.block_until_ready((prob, angle, slope, fric))

    prob_r, (angle_r, slope_r, fric_r) = reference_forward(z, params)
    assert prob.shape == (B, 2) and angle.shape == (B, 1)
    assert slope.shape == (B, 5) and fric.shape == (B, 1)
    assert jnp.allclose(angle, angle_r, atol=1e-4), "angle mismatch"
    assert jnp.allclose(slope, slope_r, atol=1e-4), "slope_material mismatch"
    assert jnp.allclose(fric, fric_r, atol=1e-4), "friction_coeff mismatch"
    assert jnp.allclose(prob, prob_r, atol=1e-4), "prob mismatch"

    # --- non-tile-multiple batch: multi-tile path + boundary block handling ---
    B2 = 400
    z2 = jax.random.normal(kz2, (B2, N_LATENTS), jnp.float32)
    prob2, (angle2, slope2, fric2) = binary_decoder_forward(z2, params)
    jax.block_until_ready((prob2, angle2, slope2, fric2))
    prob2_r, (angle2_r, slope2_r, fric2_r) = reference_forward(z2, params)
    assert jnp.allclose(angle2, angle2_r, atol=1e-4), "angle mismatch (multi-tile)"
    assert jnp.allclose(slope2, slope2_r, atol=1e-4), "slope mismatch (multi-tile)"
    assert jnp.allclose(fric2, fric2_r, atol=1e-4), "friction mismatch (multi-tile)"
    assert jnp.allclose(prob2, prob2_r, atol=1e-4), "prob mismatch (multi-tile)"

    print("KERNEL_OK")
</pallas_src>

<mosaic_0001>
module attributes {stable_mosaic.version = 11 : i64} {
  func.func @binary_decoder_kernel(%arg0: i32, %arg1: memref<8x16xf32, #tpu.memory_space<vmem>>, %arg2: memref<8x16xf32, #tpu.memory_space<vmem>>, %arg3: memref<8x1xf32, #tpu.memory_space<vmem>>, %arg4: memref<5x1xf32, #tpu.memory_space<vmem>>, %arg5: memref<9x8xf32, #tpu.memory_space<vmem>>) attributes {dimension_semantics = [#tpu.dimension_semantics<parallel>], iteration_bounds = array<i64: 1>, scalar_prefetch = 0 : i64, scratch_operands = 0 : i64, tpu.core_type = #tpu.core_type<tc>, window_params = [{transform_indices = @transform_0, window_bounds = array<i64: 8, 16>}, {pipeline_mode = #tpu.pipeline_mode<synchronous>, transform_indices = @transform_1, window_bounds = array<i64: 8, 16>}, {pipeline_mode = #tpu.pipeline_mode<synchronous>, transform_indices = @transform_2, window_bounds = array<i64: 8, 1>}, {pipeline_mode = #tpu.pipeline_mode<synchronous>, transform_indices = @transform_3, window_bounds = array<i64: 5, 1>}, {transform_indices = @transform_4, window_bounds = array<i64: 9, 8>}]} {
    %c0 = arith.constant 0 : index
    %c0_0 = arith.constant 0 : index
    %0 = vector.load %arg2[%c0, %c0_0] : memref<8x16xf32, #tpu.memory_space<vmem>>, vector<8x16xf32>
    %c0_1 = arith.constant 0 : index
    %c0_2 = arith.constant 0 : index
    %1 = vector.load %arg1[%c0_1, %c0_2] : memref<8x16xf32, #tpu.memory_space<vmem>>, vector<8x16xf32>
    %cst = arith.constant dense<0.000000e+00> : vector<8x8xf32>
    %2 = tpu.matmul %0, %1, %cst {dimension_numbers = #tpu.dot_dimension_numbers<[1], [1], [0], [0], [0, 0, 1, 0], [], []>} : vector<8x16xf32>, vector<8x16xf32>, vector<8x8xf32> -> vector<8x8xf32>
    %c0_3 = arith.constant 0 : index
    %c0_4 = arith.constant 0 : index
    %3 = vector.load %arg3[%c0_3, %c0_4] : memref<8x1xf32, #tpu.memory_space<vmem>>, vector<8x1xf32>
    %4 = vector.broadcast %3 : vector<8x1xf32> to vector<8x8xf32>
    %5 = arith.addf %2, %4 : vector<8x8xf32>
    %6 = vector.extract_strided_slice %5 {offsets = [0, 0], sizes = [1, 8], strides = [1, 1]} : vector<8x8xf32> to vector<1x8xf32>
    %7 = vector.extract_strided_slice %5 {offsets = [1, 0], sizes = [5, 8], strides = [1, 1]} : vector<8x8xf32> to vector<5x8xf32>
    %cst_5 = arith.constant dense<0xFF800000> : vector<8xf32>
    %8 = vector.multi_reduction <maximumf>, %7, %cst_5 [0] : vector<5x8xf32> to vector<8xf32>
    %9 = vector.shape_cast %8 : vector<8xf32> to vector<1x8xf32>
    %10 = vector.broadcast %9 : vector<1x8xf32> to vector<5x8xf32>
    %11 = arith.subf %7, %10 : vector<5x8xf32>
    %12 = math.exp %11 : vector<5x8xf32>
    %cst_6 = arith.constant dense<0.000000e+00> : vector<8xf32>
    %13 = vector.multi_reduction <add>, %12, %cst_6 [0] : vector<5x8xf32> to vector<8xf32>
    %14 = vector.shape_cast %13 : vector<8xf32> to vector<1x8xf32>
    %15 = vector.broadcast %14 : vector<1x8xf32> to vector<5x8xf32>
    %16 = arith.divf %12, %15 : vector<5x8xf32>
    %c0_7 = arith.constant 0 : index
    %c0_8 = arith.constant 0 : index
    %17 = vector.load %arg4[%c0_7, %c0_8] : memref<5x1xf32, #tpu.memory_space<vmem>>, vector<5x1xf32>
    %18 = vector.broadcast %17 : vector<5x1xf32> to vector<5x8xf32>
    %19 = arith.mulf %16, %18 : vector<5x8xf32>
    %cst_9 = arith.constant dense<0.000000e+00> : vector<8xf32>
    %20 = vector.multi_reduction <add>, %19, %cst_9 [0] : vector<5x8xf32> to vector<8xf32>
    %21 = vector.shape_cast %20 : vector<8xf32> to vector<1x8xf32>
    %22 = math.cos %6 : vector<1x8xf32>
    %23 = arith.mulf %21, %22 : vector<1x8xf32>
    %24 = math.sin %6 : vector<1x8xf32>
    %25 = tpu.concatenate %23, %24 in 0 : vector<1x8xf32>, vector<1x8xf32> -> vector<2x8xf32>
    %26 = arith.negf %25 : vector<2x8xf32>
    %27 = math.exp %26 : vector<2x8xf32>
    %cst_10 = arith.constant 1.000000e+00 : f32
    %28 = vector.broadcast %cst_10 : f32 to vector<2x8xf32>
    %29 = arith.addf %28, %27 : vector<2x8xf32>
    %30 = arith.divf %28, %29 : vector<2x8xf32>
    %c0_11 = arith.constant 0 : index
    %c0_12 = arith.constant 0 : index
    %31 = vector.load %arg5[%c0_11, %c0_12] : memref<9x8xf32, #tpu.memory_space<vmem>>, vector<1x8xf32>
    tpu.vector_store %arg5[%c0_11, %c0_12], %6 {strides = array<i32>} : memref<9x8xf32, #tpu.memory_space<vmem>>, vector<1x8xf32>,
    %c1 = arith.constant 1 : index
    %c0_13 = arith.constant 0 : index
    %32 = vector.load %arg5[%c1, %c0_13] : memref<9x8xf32, #tpu.memory_space<vmem>>, vector<5x8xf32>
    tpu.vector_store %arg5[%c1, %c0_13], %16 {strides = array<i32>} : memref<9x8xf32, #tpu.memory_space<vmem>>, vector<5x8xf32>,
    %c6 = arith.constant 6 : index
    %c0_14 = arith.constant 0 : index
    %33 = vector.load %arg5[%c6, %c0_14] : memref<9x8xf32, #tpu.memory_space<vmem>>, vector<1x8xf32>
    tpu.vector_store %arg5[%c6, %c0_14], %21 {strides = array<i32>} : memref<9x8xf32, #tpu.memory_space<vmem>>, vector<1x8xf32>,
    %c7 = arith.constant 7 : index
    %c0_15 = arith.constant 0 : index
    %34 = vector.load %arg5[%c7, %c0_15] : memref<9x8xf32, #tpu.memory_space<vmem>>, vector<2x8xf32>
    tpu.vector_store %arg5[%c7, %c0_15], %30 {strides = array<i32>} : memref<9x8xf32, #tpu.memory_space<vmem>>, vector<2x8xf32>,
    return
  }
  func.func @transform_0(%arg0: i32) -> (i32, i32) {
    %c0_i32 = arith.constant 0 : i32
    %c0_i32_0 = arith.constant 0 : i32
    return %arg0, %c0_i32 : i32, i32
  }
  func.func @transform_1(%arg0: i32) -> (i32, i32) {
    %c0_i32 = arith.constant 0 : i32
    %c0_i32_0 = arith.constant 0 : i32
    %c0_i32_1 = arith.constant 0 : i32
    return %c0_i32, %c0_i32_0 : i32, i32
  }
  func.func @transform_2(%arg0: i32) -> (i32, i32) {
    %c0_i32 = arith.constant 0 : i32
    %c0_i32_0 = arith.constant 0 : i32
    %c0_i32_1 = arith.constant 0 : i32
    return %c0_i32, %c0_i32_0 : i32, i32
  }
  func.func @transform_3(%arg0: i32) -> (i32, i32) {
    %c0_i32 = arith.constant 0 : i32
    %c0_i32_0 = arith.constant 0 : i32
    %c0_i32_1 = arith.constant 0 : i32
    return %c0_i32, %c0_i32_0 : i32, i32
  }
  func.func @transform_4(%arg0: i32) -> (i32, i32) {
    %c0_i32 = arith.constant 0 : i32
    %c0_i32_0 = arith.constant 0 : i32
    return %c0_i32, %arg0 : i32, i32
  }
}

</mosaic_0001>

<llo_original>
// kernel: tpu_custom_call.1
$region0: #{tpu_custom_call.1}
  #allocation0 [shape = 'u32[]', space=smem, size = 0x4, offset = 0x4, fixed_abs, tag = 'smem constant byte address 0x4 - core index']
  #allocation1 [shape = 'u32[144,128]{1,0:T(1,128)}', space=vmem, size = 0x12000, scoped, tag = 'internal scratch']
  %s0 = inlined_call_operand.vmem [shape: f32[8,16], index: 0, kind: input, shape index: {}]
  %s1 = inlined_call_operand.vmem [shape: f32[8,16], index: 1, kind: input, shape index: {}]
  %s2 = inlined_call_operand.vmem [shape: f32[8,1], index: 2, kind: input, shape index: {}]
  %s3 = inlined_call_operand.vmem [shape: f32[5,1], index: 3, kind: input, shape index: {}]
  %s4 = inlined_call_operand.vmem [shape: f32[9,8], index: 4, kind: output, shape index: {}]
  %s5 = sld [smem:[#allocation0]]
  $region26: #{tpu_custom_call.1} parent=0
    _
  %s7 = ssub.s32 1, %s5
  %s8 = scalar_select 0, %s7, %s5
  // Predicated region
  $region2: #{tpu_custom_call.1} parent=0 // pred_check
    _
  $region3: #{tpu_custom_call.1} parent=0 // pred_check_branch
    %10 = sbr.rel (0) target = $region5
  $region4: #{tpu_custom_call.1} parent=0 // pred_region
    _
  $region5: #{tpu_custom_call.1} parent=0 // pred_fallthru
    _
  // Predicated region
  $region6: #{tpu_custom_call.1} parent=0 // pred_check
    _
  $region7: #{tpu_custom_call.1} parent=0 // pred_check_branch
    %12 = sbr.rel (0) target = $region9
  $region8: #{tpu_custom_call.1} parent=0 // pred_region
    _
  $region9: #{tpu_custom_call.1} parent=0 // pred_fallthru
    _
  // Predicated region
  $region10: #{tpu_custom_call.1} parent=0 // pred_check
    _
  $region11: #{tpu_custom_call.1} parent=0 // pred_check_branch
    %14 = sbr.rel (0) target = $region13
  $region12: #{tpu_custom_call.1} parent=0 // pred_region
    _
  $region13: #{tpu_custom_call.1} parent=0 // pred_fallthru
    _
  // Predicated region
  $region14: #{tpu_custom_call.1} parent=0 // pred_check
    _
  $region15: #{tpu_custom_call.1} parent=0 // pred_check_branch
    %16 = sbr.rel (0) target = $region17
  $region16: #{tpu_custom_call.1} parent=0 // pred_region
    _
  $region17: #{tpu_custom_call.1} parent=0 // pred_fallthru
    _
  %v17 = vld [vmem:[%s1] sm:$0xff]
  %v18 = vld [vmem:[%s0] sm:$0xff]
  %v19 = vld [vmem:[%s2] sm:$0xff]
  %21 = vset.pattern.permute.xlu0 0
  %22 = vperm.xlu0 %21, %v19
  %v23 = vpop.permute.xlu0 %22
  %vm25 = vcmask 130048
  %v27 = vsel %vm25, %v17, 0
  %v30 = vsel %vm25, %v18, 0
  %32 = vmatprep.subr.mxu0 0.0
  %33 = vmatpush1.xpose.msra.mxu0 0.0
  %34 = vmatprep.subr.mxu0 0.0
  %35 = vmatpush1.xpose.msra.mxu0 0.0
  %36 = vmatprep.subr.mxu0 0.0
  %37 = vmatpush1.xpose.msra.mxu0 0.0
  %38 = vmatprep.subr.mxu0 0.0
  %39 = vmatpush1.xpose.msra.mxu0 0.0
  %40 = vmatprep.subr.mxu0 0.0
  %41 = vmatpush1.xpose.msra.mxu0 0.0
  %42 = vmatprep.subr.mxu0 0.0
  %43 = vmatpush1.xpose.msra.mxu0 0.0
  %44 = vmatprep.subr.mxu0 0.0
  %45 = vmatpush1.xpose.msra.mxu0 0.0
  %46 = vmatprep.subr.mxu0 0.0
  %47 = vmatpush1.xpose.msra.mxu0 0.0
  %48 = vmatprep.subr.mxu0 0.0
  %49 = vmatpush1.xpose.msra.mxu0 0.0
  %50 = vmatprep.subr.mxu0 0.0
  %51 = vmatpush1.xpose.msra.mxu0 0.0
  %52 = vmatprep.subr.mxu0 0.0
  %53 = vmatpush1.xpose.msra.mxu0 0.0
  %54 = vmatprep.subr.mxu0 0.0
  %55 = vmatpush1.xpose.msra.mxu0 0.0
  %56 = vmatprep.subr.mxu0 0.0
  %57 = vmatpush1.xpose.msra.mxu0 0.0
  %58 = vmatprep.subr.mxu0 0.0
  %59 = vmatpush1.xpose.msra.mxu0 0.0
  %60 = vmatprep.subr.mxu0 0.0
  %61 = vmatpush1.xpose.msra.mxu0 0.0
  %62 = vmatprep.subr.mxu0 0.0
  %63 = vmatpush1.xpose.msra.mxu0 %v30
  %64 = vmatprep.subr.mxu0 0.0
  %65 = vmatpush2.xpose.msra.mxu0 0.0
  %66 = vmatprep.subr.mxu0 0.0
  %67 = vmatpush2.xpose.msra.mxu0 0.0
  %68 = vmatprep.subr.mxu0 0.0
  %69 = vmatpush2.xpose.msra.mxu0 0.0
  %70 = vmatprep.subr.mxu0 0.0
  %71 = vmatpush2.xpose.msra.mxu0 0.0
  %72 = vmatprep.subr.mxu0 0.0
  %73 = vmatpush2.xpose.msra.mxu0 0.0
  %74 = vmatprep.subr.mxu0 0.0
  %75 = vmatpush2.xpose.msra.mxu0 0.0
  %76 = vmatprep.subr.mxu0 0.0
  %77 = vmatpush2.xpose.msra.mxu0 0.0
  %78 = vmatprep.subr.mxu0 0.0
  %79 = vmatpush2.xpose.msra.mxu0 0.0
  %80 = vmatprep.subr.mxu0 0.0
  %81 = vmatpush2.xpose.msra.mxu0 0.0
  %82 = vmatprep.subr.mxu0 0.0
  %83 = vmatpush2.xpose.msra.mxu0 0.0
  %84 = vmatprep.subr.mxu0 0.0
  %85 = vmatpush2.xpose.msra.mxu0 0.0
  %86 = vmatprep.subr.mxu0 0.0
  %87 = vmatpush2.xpose.msra.mxu0 0.0
  %88 = vmatprep.subr.mxu0 0.0
  %89 = vmatpush2.xpose.msra.mxu0 0.0
  %90 = vmatprep.subr.mxu0 0.0
  %91 = vmatpush2.xpose.msra.mxu0 0.0
  %92 = vmatprep.subr.mxu0 0.0
  %93 = vmatpush2.xpose.msra.mxu0 0.0
  %94 = vmatprep.subr.mxu0 0.0
  %95 = vmatpush2.xpose.msra.mxu0 0.0
  %96 = vmatprep.mubr.f32.mxu0 0.0
  %97 = vmatmul.mubr.f32.gmra.mxu0 %v27
  %v98 = vpop.f32.mrf.mxu0
  %v99 = vadd.f32 %v23, %v98
  %v100 = vpop.f32.mrf.mxu0
  %101 = vdwg.mxu0
  %vm102 = vcmask 62465
  %v103 = vsel %vm102, %v99, -inf
  %v104 = vrot.slane %v103, 4
  %v105 = vmax.f32 %v103, %v104
  %v106 = vrot.slane %v105, 2
  %v107 = vmax.f32 %v105, %v106
  %v108 = vrot.slane %v107, 1
  %v109 = vmax.f32 %v107, %v108
  %v110 = vsub.f32 %v99, %v109
  %v111 = vmul.f32 %v110, 1.442695
  %v112 = vpow.pop %v111
  %v114 = vrot.slane %v112, 1
  %vm116 = vcmask 61440
  %v117 = vsel %vm116, %v114, 0.0
  %v118 = vrot.slane %v117, 4
  %v119 = vadd.f32 %v117, %v118
  %v120 = vrot.slane %v119, 2
  %v121 = vadd.f32 %v119, %v120
  %v122 = vrot.slane %v121, 1
  %v123 = vadd.f32 %v121, %v122
  %v124 = vrcp.pop %v123
  %v125 = vmul.f32 %v112, %v124
  %v126 = vld [vmem:[%s3] sm:$0x1f]
  %128 = vset.pattern.permute.xlu0 0
  %129 = vperm.xlu0 %128, %v126
  %v130 = vpop.permute.xlu0 %129
  %v131 = vrot.slane %v130, 7
  %v133 = vmul.f32 %v125, %v131
  %v135 = vrot.slane %v133, 1
  %v137 = vsel %vm116, %v135, 0.0
  %v138 = vrot.slane %v137, 4
  %v139 = vadd.f32 %v137, %v138
  %v140 = vrot.slane %v139, 2
  %v141 = vadd.f32 %v139, %v140
  %v142 = vrot.slane %v141, 1
  %v143 = vadd.f32 %v141, %v142
  %v144 = vand.u32 2147483647, %v99
  %vm145 = vcmp.le.f32.partialorder %v144, 0.7853982
  %vm146 = vcmp.lt.s32.totalorder %v99, 0
  %v147 = vand.u32 %v99, 2139095040
  %v148 = vshrl.u32 %v147, 23
  %v149 = vsub.s32 %v148, 127
  %v150 = vand.u32 2147483647, %v99
  %v151 = vand.u32 %v150, 8388607
  %v152 = vor.u32 %v151, 8388608
  %v153 = vsub.s32 0, %v152
  %v154 = vadd.s32 %v149, 1
  %vm155 = vcmp.gt.s32.totalorder %v154, 0
  %v156 = vsel %vm155, %v154, 0
  %v157 = vshrl.u32 %v156, 5
  %v158 = vand.u32 %v156, 31
  %v159 = vsub.s32 32, %v158
  %v160 = vshrl.u32 683565275, %v159
  %v161 = vshll.u32 683565275, %v158
  %v162 = vshrl.u32 2475754826, %v159
  %v163 = vor.u32 %v161, %v162
  %v164 = vshll.u32 2475754826, %v158
  %v165 = vshrl.u32 2131351028, %v159
  %v166 = vor.u32 %v164, %v165
  %v167 = vshll.u32 2131351028, %v158
  %v168 = vshrl.u32 2102212464, %v159
  %v169 = vor.u32 %v167, %v168
  %v170 = vshll.u32 2102212464, %v158
  %v171 = vshrl.u32 920167782, %v159
  %v172 = vor.u32 %v170, %v171
  %v173 = vshll.u32 920167782, %v158
  %v174 = vshrl.u32 1326507024, %v159
  %v175 = vor.u32 %v173, %v174
  %vm176 = vcmp.lt.s32.totalorder %v157, 1
  %vm177 = vcmp.lt.s32.totalorder %v157, 2
  %vm178 = vcmp.lt.s32.totalorder %v157, 3
  %vm179 = vcmp.lt.s32.totalorder %v157, 4
  %v180 = vsel %vm176, %v160, %v163
  %v181 = vsel %vm179, %v169, 2102212464
  %v182 = vsel %vm178, %v166, %v181
  %v183 = vsel %vm177, %v180, %v182
  %v184 = vsel %vm176, %v163, %v166
  %v185 = vsel %vm179, %v172, 920167782
  %v186 = vsel %vm178, %v169, %v185
  %v187 = vsel %vm177, %v184, %v186
  %v188 = vsel %vm176, %v166, %v169
  %v189 = vsel %vm179, %v175, 1326507024
  %v190 = vsel %vm178, %v172, %v189
  %v191 = vsel %vm177, %v188, %v190
  %v192 = vshll.u32 %v152, 8
  %v193 = vmul.u32.u64.compose %v192, %v191
  %v194 = vextract.low.u32 %v193
  %v195 = vextract.high.u32 %v193
  %v196 = vmul.u32.u64.compose %v192, %v187
  %v197 = vextract.low.u32 %v196
  %v198 = vextract.high.u32 %v196
  %v199 = vmul.u32 %v192, %v183
  %v200 = vadd.s32 %v195, %v197
  %vm201 = vc.u32 %v195, %v197
  %v202 = vadd.s32 %v198, 1
  %v203 = vsel %vm201, %v202, %v198
  %v204 = vadd.s32 %v199, %v203
  %v205 = vadd.s32 %v204, 536870912
  %v206 = vshrl.u32 %v205, 30
  %v207 = vshll.u32 %v206, 30
  %v208 = vsub.s32 %v204, %v207
  %vm209 = vcmp.lt.s32.totalorder %v208, 0
  %v210 = vsub.s32 0, %v208
  %v211 = vsel %vm209, %v210, %v208
  %v212 = vclz %v211
  %v213 = vsub.s32 %v212, 2
  %vm214 = vcmp.gt.s32.totalorder 0, %v213
  %v215 = vsel %vm214, 0, %v213
  %v216 = vsub.s32 32, %v215
  %v217 = vshll.u32 %v208, %v215
  %v218 = vshrl.u32 %v200, %v216
  %v219 = vor.u32 %v217, %v218
  %v220 = vsub.s32 4294967266, %v215
  %v221 = vadd.s32 %v220, 127
  %v222 = vshll.u32 %v221, 23
  %v223 = vor.u32 4788187, %v222
  %v224 = vand.u32 2147483647, %v223
  %v226 = vcvt.s32.f32 %v219
  %v227 = vmul.f32 %v226, %v224
  %v228 = vxor.u32 %v227, 2147483648
  %v229 = vsel %vm146, %v228, %v227
  %v230 = vsub.s32 4, %v206
  %v231 = vsel %vm146, %v230, %v206
  %v232 = vsel %vm145, %v99, %v229
  %v233 = vsel %vm145, 0, %v231
  %v234 = vcosq.f32.pop %v232
  %v235 = vsinq.f32.pop %v232
  %vm236 = vweird.f32 %v99
  %v237 = vand.u32 %v233, 3
  %vm238 = vcmp.lt.s32.totalorder %v237, 2
  %vm239 = vcmp.eq.s32.totalorder %v237, 0
  %v240 = vxor.u32 %v235, 2147483648
  %v241 = vsel %vm239, %v234, %v240
  %vm242 = vcmp.eq.s32.totalorder %v237, 2
  %v243 = vxor.u32 %v234, 2147483648
  %v244 = vsel %vm242, %v243, %v235
  %v245 = vsel %vm238, %v241, %v244
  %v246 = vsel %vm236, nan, %v245
  %v247 = vmul.f32 %v143, %v246
  %v248 = vand.u32 2147483647, %v99
  %vm249 = vcmp.le.f32.partialorder %v248, 0.7853982
  %vm250 = vcmp.lt.s32.totalorder %v99, 0
  %v251 = vand.u32 %v99, 2139095040
  %v252 = vshrl.u32 %v251, 23
  %v253 = vsub.s32 %v252, 127
  %v254 = vand.u32 2147483647, %v99
  %v255 = vand.u32 %v254, 8388607
  %v256 = vor.u32 %v255, 8388608
  %v257 = vsub.s32 0, %v256
  %v258 = vadd.s32 %v253, 1
  %vm259 = vcmp.gt.s32.totalorder %v258, 0
  %v260 = vsel %vm259, %v258, 0
  %v261 = vshrl.u32 %v260, 5
  %v262 = vand.u32 %v260, 31
  %v263 = vsub.s32 32, %v262
  %v264 = vshrl.u32 683565275, %v263
  %v265 = vshll.u32 683565275, %v262
  %v266 = vshrl.u32 2475754826, %v263
  %v267 = vor.u32 %v265, %v266
  %v268 = vshll.u32 2475754826, %v262
  %v269 = vshrl.u32 2131351028, %v263
  %v270 = vor.u32 %v268, %v269
  %v271 = vshll.u32 2131351028, %v262
  %v272 = vshrl.u32 2102212464, %v263
  %v273 = vor.u32 %v271, %v272
  %v274 = vshll.u32 2102212464, %v262
  %v275 = vshrl.u32 920167782, %v263
  %v276 = vor.u32 %v274, %v275
  %v277 = vshll.u32 920167782, %v262
  %v278 = vshrl.u32 1326507024, %v263
  %v279 = vor.u32 %v277, %v278
  %vm280 = vcmp.lt.s32.totalorder %v261, 1
  %vm281 = vcmp.lt.s32.totalorder %v261, 2
  %vm282 = vcmp.lt.s32.totalorder %v261, 3
  %vm283 = vcmp.lt.s32.totalorder %v261, 4
  %v284 = vsel %vm280, %v264, %v267
  %v285 = vsel %vm283, %v273, 2102212464
  %v286 = vsel %vm282, %v270, %v285
  %v287 = vsel %vm281, %v284, %v286
  %v288 = vsel %vm280, %v267, %v270
  %v289 = vsel %vm283, %v276, 920167782
  %v290 = vsel %vm282, %v273, %v289
  %v291 = vsel %vm281, %v288, %v290
  %v292 = vsel %vm280, %v270, %v273
  %v293 = vsel %vm283, %v279, 1326507024
  %v294 = vsel %vm282, %v276, %v293
  %v295 = vsel %vm281, %v292, %v294
  %v296 = vshll.u32 %v256, 8
  %v297 = vmul.u32.u64.compose %v296, %v295
  %v298 = vextract.low.u32 %v297
  %v299 = vextract.high.u32 %v297
  %v300 = vmul.u32.u64.compose %v296, %v291
  %v301 = vextract.low.u32 %v300
  %v302 = vextract.high.u32 %v300
  %v303 = vmul.u32 %v296, %v287
  %v304 = vadd.s32 %v299, %v301
  %vm305 = vc.u32 %v299, %v301
  %v306 = vadd.s32 %v302, 1
  %v307 = vsel %vm305, %v306, %v302
  %v308 = vadd.s32 %v303, %v307
  %v309 = vadd.s32 %v308, 536870912
  %v310 = vshrl.u32 %v309, 30
  %v311 = vshll.u32 %v310, 30
  %v312 = vsub.s32 %v308, %v311
  %vm313 = vcmp.lt.s32.totalorder %v312, 0
  %v314 = vsub.s32 0, %v312
  %v315 = vsel %vm313, %v314, %v312
  %v316 = vclz %v315
  %v317 = vsub.s32 %v316, 2
  %vm318 = vcmp.gt.s32.totalorder 0, %v317
  %v319 = vsel %vm318, 0, %v317
  %v320 = vsub.s32 32, %v319
  %v321 = vshll.u32 %v312, %v319
  %v322 = vshrl.u32 %v304, %v320
  %v323 = vor.u32 %v321, %v322
  %v324 = vsub.s32 4294967266, %v319
  %v325 = vadd.s32 %v324, 127
  %v326 = vshll.u32 %v325, 23
  %v327 = vor.u32 4788187, %v326
  %v328 = vand.u32 2147483647, %v327
  %v330 = vcvt.s32.f32 %v323
  %v331 = vmul.f32 %v330, %v328
  %v332 = vxor.u32 %v331, 2147483648
  %v333 = vsel %vm250, %v332, %v331
  %v334 = vsub.s32 4, %v310
  %v335 = vsel %vm250, %v334, %v310
  %v336 = vsel %vm249, %v99, %v333
  %v337 = vsel %vm249, 0, %v335
  %v338 = vcosq.f32.pop %v336
  %v339 = vsinq.f32.pop %v336
  %vm340 = vweird.f32 %v99
  %v341 = vadd.s32 %v337, 3
  %v342 = vand.u32 %v341, 3
  %vm343 = vcmp.lt.s32.totalorder %v342, 2
  %vm344 = vcmp.eq.s32.totalorder %v342, 0
  %v345 = vxor.u32 %v339, 2147483648
  %v346 = vsel %vm344, %v338, %v345
  %vm347 = vcmp.eq.s32.totalorder %v342, 2
  %v348 = vxor.u32 %v338, 2147483648
  %v349 = vsel %vm347, %v348, %v339
  %v350 = vsel %vm343, %v346, %v349
  %v351 = vsel %vm340, nan, %v350
  %v353 = vrot.slane %v351, 7
  %vm355 = vcmask 1040384
  %v356 = vsel %vm355, %v247, %v353
  %v357 = vxor.u32 %v356, 2147483648
  %v358 = vmul.f32 %v357, 1.442695
  %v359 = vpow.pop %v358
  %v360 = vadd.f32 %v359, 1.0
  %v361 = vrcp.pop %v360
  %v362 = vmul.f32 1.0, %v361
  %vm363 = vcmask 57344
  %364 = vst.msk [vmem:[%s4] sm:$0x1] %vm363, %v99
  %365 = vst.msk [vmem:[%s4] sm:$0x3e] %vm102, %v125
  %366 = vst.msk [vmem:[%s4 + $0x6] sm:$0x1] %vm363, %v143
  %vm367 = vcmask 58368
  %368 = vst.msk [vmem:[%s4 + $0x7] sm:$0x3] %vm367, %v362
  // Predicated region
  $region18: #{tpu_custom_call.1} parent=0 // pred_check
    _
  $region19: #{tpu_custom_call.1} parent=0 // pred_check_branch
    %370 = sbr.rel (0) target = $region21
  $region20: #{tpu_custom_call.1} parent=0 // pred_region
    _
  $region21: #{tpu_custom_call.1} parent=0 // pred_fallthru
    _
  // Predicated region
  $region22: #{tpu_custom_call.1} parent=0 // pred_check
    _
  $region23: #{tpu_custom_call.1} parent=0 // pred_check_branch
    %372 = sbr.rel (0) target = $region25
  $region24: #{tpu_custom_call.1} parent=0 // pred_region
    _
  $region25: #{tpu_custom_call.1} parent=0 // pred_fallthru
    _

</llo_original>
